<compile_context>
chip_gen: v7x
topology: tpu7x:2x2x1
jax: 0.10.0
libtpu: 0.0.40
codegen_flags: <defaults>
</compile_context>

<pallas_src>
import functools

import jax
import jax.numpy as jnp
from jax.experimental import pallas as pl
from jax.experimental.pallas import tpu as pltpu


# ----------------------------------------------------------------------------
# Kernel 1: linear transform + attention coefficients (run once per layer).
# ----------------------------------------------------------------------------
def _gat_lin_kernel(x_ref, w_ref, a_ref, xwh_ref, coef_ref, *, heads, f_out):
    x = x_ref[...]                      # (N, F_in)  f32
    w = w_ref[...]                      # (F_in, heads*f_out)  f32
    a = a_ref[...]                      # (heads*f_out, 2*heads) block-diagonal

    # xW on the MXU with bf16 operands, f32 accumulate.
    xw = jnp.dot(x.astype(jnp.bfloat16), w.astype(jnp.bfloat16),
                 preferred_element_type=jnp.float32)          # (N, heads*f_out)

    # One matmul produces every head's src/dst attention coefficients:
    #   coef[:, h]         = <xw_h, a_src_h>   (source logits)
    #   coef[:, heads + h] = <xw_h, a_dst_h>   (destination logits)
    coef_ref[...] = jnp.dot(xw, a, preferred_element_type=jnp.float32)

    # One-time split of xW into head-major layout so the attention kernel can
    # index heads on the leading axis (no 32-lane slicing per grid step).
    for h in range(heads):
        xwh_ref[h] = xw[:, h * f_out:(h + 1) * f_out].astype(xwh_ref.dtype)


# ----------------------------------------------------------------------------
# Kernel 2: attention + aggregation over a tile of destination rows.
# ----------------------------------------------------------------------------
def _gat_attn_kernel(adj_ref, xwh_ref, srct_ref, dstc_ref, b_ref, out_ref,
                     *, heads, f_out, apply_elu, neg_slope=0.2):
    adj = adj_ref[...]                                     # (TM, N) int8
    # Hoisted additive mask shared across all heads (replaces per-head where).
    mask_bias = jnp.where(adj > 0, jnp.float32(0.0), jnp.float32(-1e30))
    dstc = dstc_ref[...]                                   # (TM, heads) f32

    outs = []
    for h in range(heads):
        # e[i, j] = LeakyReLU(alpha_dst[i] + alpha_src[j]) + mask_bias[i, j]
        e = dstc[:, h:h + 1] + srct_ref[h:h + 1, :]        # (TM, N)
        e = jnp.where(e > 0, e, neg_slope * e)
        e = e + mask_bias

        # Row softmax over sources.  Masked logits are ~-1e30 so exp() is
        # exactly 0 -- no second mask needed.  Reciprocal-multiply keeps the
        # divide off the VALU (EUP slot instead).
        e = e - jnp.max(e, axis=-1, keepdims=True)
        p = jnp.exp(e)
        denom = jnp.sum(p, axis=-1, keepdims=True)
        attn = p * pl.reciprocal(denom, approx=True)       # (TM, N)

        # Aggregate messages on the MXU (bf16 operands, f32 accumulate).
        out_h = jnp.dot(attn.astype(jnp.bfloat16), xwh_ref[h],
                        preferred_element_type=jnp.float32)  # (TM, f_out)
        outs.append(out_h)

    # Single lane-dense store with bias add (and ELU for layer 1) fused in.
    out = outs[0] if heads == 1 else jnp.concatenate(outs, axis=-1)
    out = out + b_ref[...]
    if apply_elu:
        out = jnp.where(out > 0, out, jnp.exp(out) - 1.0)
    out_ref[...] = out.astype(out_ref.dtype)


# ----------------------------------------------------------------------------
# One GATConv layer (two pallas_calls).
# ----------------------------------------------------------------------------
def gat_conv(x, adj_i8, w, a_src, a_dst, bias, *, heads, f_out, apply_elu,
             block_rows):
    n, _ = x.shape
    hf = heads * f_out
    assert n % block_rows == 0, "demo assumes N divisible by block_rows"

    # Block-diagonal coefficient matrix A: (heads*f_out, 2*heads).
    a_mat = jnp.zeros((hf, 2 * heads), jnp.float32)
    for h in range(heads):
        a_mat = a_mat.at[h * f_out:(h + 1) * f_out, h].set(a_src[h])
        a_mat = a_mat.at[h * f_out:(h + 1) * f_out, heads + h].set(a_dst[h])

    vmem = pl.BlockSpec(memory_space=pltpu.MemorySpace.VMEM)

    # --- kernel 1: xW + attention coefficients -------------------------------
    xwh, coef = pl.pallas_call(
        functools.partial(_gat_lin_kernel, heads=heads, f_out=f_out),
        out_shape=(jax.ShapeDtypeStruct((heads, n, f_out), jnp.bfloat16),
                   jax.ShapeDtypeStruct((n, 2 * heads), jnp.float32)),
        in_specs=[vmem, vmem, vmem],
        out_specs=(vmem, vmem),
    )(x, w, a_mat)

    # Wrapper-side layout plumbing: source coefficients as (heads, N) rows.
    src_t = coef[:, :heads].T           # (heads, N)
    dst_c = coef[:, heads:]             # (N, heads)

    # --- kernel 2: row-tiled attention + aggregation --------------------------
    grid = (n // block_rows,)
    out = pl.pallas_call(
        functools.partial(_gat_attn_kernel, heads=heads, f_out=f_out,
                          apply_elu=apply_elu),
        out_shape=jax.ShapeDtypeStruct((n, hf), jnp.float32),
        grid=grid,
        in_specs=[
            pl.BlockSpec((block_rows, n), lambda i: (i, 0)),        # adj rows
            pl.BlockSpec((heads, n, f_out), lambda i: (0, 0, 0)),   # xW (res.)
            pl.BlockSpec((heads, n), lambda i: (0, 0)),             # src coef
            pl.BlockSpec((block_rows, heads), lambda i: (i, 0)),    # dst coef
            pl.BlockSpec((1, hf), lambda i: (0, 0)),                # bias
        ],
        out_specs=pl.BlockSpec((block_rows, hf), lambda i: (i, 0)),
        compiler_params=pltpu.CompilerParams(
            dimension_semantics=("parallel",),
            vmem_limit_bytes=32 * 1024 * 1024),
    )(adj_i8, xwh, src_t, dst_c, bias)
    return out


# ----------------------------------------------------------------------------
# Parameters / model.
# ----------------------------------------------------------------------------
def init_params(key, input_dim, output_dim, hidden_dim, heads):
    ks = jax.random.split(key, 6)

    def glorot(k, shape):
        fan_in, fan_out = shape[0], shape[-1]
        limit = (6.0 / (fan_in + fan_out)) ** 0.5
        return jax.random.uniform(k, shape, jnp.float32, -limit, limit)

    return dict(
        # conv1: GATConv(input_dim, hidden_dim, heads=heads), concat=True
        w1=glorot(ks[0], (input_dim, heads * hidden_dim)),
        a_src1=glorot(ks[1], (heads, hidden_dim)),
        a_dst1=glorot(ks[2], (heads, hidden_dim)),
        b1=jnp.zeros((1, heads * hidden_dim), jnp.float32),
        # conv2: GATConv(hidden_dim*heads, output_dim, heads=1)
        w2=glorot(ks[3], (heads * hidden_dim, output_dim)),
        a_src2=glorot(ks[4], (1, output_dim)),
        a_dst2=glorot(ks[5], (1, output_dim)),
        b2=jnp.zeros((1, output_dim), jnp.float32),
    )


def gat_model(x, edge_index, params, *, hidden_dim, heads, output_dim,
              block_rows=8):
    n = x.shape[0]
    src, dst = edge_index[0], edge_index[1]
    # Dense int8 adjacency (row = destination, col = source) + self-loops,
    # matching PyG GATConv's add_self_loops=True default.
    # Note: parallel (duplicate) edges collapse to a single entry.
    adj = jnp.zeros((n, n), jnp.int8)
    adj = adj.at[dst, src].set(1)
    diag = jnp.arange(n)
    adj = adj.at[diag, diag].set(1)

    h = gat_conv(x, adj, params["w1"], params["a_src1"], params["a_dst1"],
                 params["b1"], heads=heads, f_out=hidden_dim, apply_elu=True,
                 block_rows=block_rows)
    out = gat_conv(h, adj, params["w2"], params["a_src2"], params["a_dst2"],
                   params["b2"], heads=1, f_out=output_dim, apply_elu=False,
                   block_rows=block_rows)
    return out


if __name__ == "__main__":
    N = 16
    input_dim = 16
    hidden_dim = 32
    heads = 4
    output_dim = 8

    key = jax.random.PRNGKey(0)
    kx, ke1, ke2, kp = jax.random.split(key, 4)

    x = jax.random.normal(kx, (N, input_dim), jnp.float32)

    # Synthetic graph: ring edges + a few random edges, shape (2, num_edges).
    ring_src = jnp.arange(N, dtype=jnp.int32)
    ring_dst = (ring_src + 1) % N
    rand_src = jax.random.randint(ke1, (N,), 0, N, dtype=jnp.int32)
    rand_dst = jax.random.randint(ke2, (N,), 0, N, dtype=jnp.int32)
    edge_index = jnp.stack([jnp.concatenate([ring_src, rand_src]),
                            jnp.concatenate([ring_dst, rand_dst])])

    params = init_params(kp, input_dim, output_dim, hidden_dim, heads)

    out = gat_model(x, edge_index, params,
                    hidden_dim=hidden_dim, heads=heads, output_dim=output_dim,
                    block_rows=8)
    out = jax.block_until_ready(out)

    assert out.shape == (N, output_dim), out.shape
    assert bool(jnp.all(jnp.isfinite(out)))
    print("KERNEL_OK")
</pallas_src>

<mosaic_0001>
module attributes {stable_mosaic.version = 11 : i64} {
  func.func @_gat_lin_kernel(%arg0: memref<16x16xf32, #tpu.memory_space<vmem>>, %arg1: memref<16x128xf32, #tpu.memory_space<vmem>>, %arg2: memref<128x8xf32, #tpu.memory_space<vmem>>, %arg3: memref<4x16x32xbf16, #tpu.memory_space<vmem>>, %arg4: memref<16x8xf32, #tpu.memory_space<vmem>>) attributes {dimension_semantics = [], scalar_prefetch = 0 : i64, scratch_operands = 0 : i64, tpu.core_type = #tpu.core_type<tc>} {
    %c0 = arith.constant 0 : index
    %c0_0 = arith.constant 0 : index
    %0 = vector.load %arg0[%c0, %c0_0] : memref<16x16xf32, #tpu.memory_space<vmem>>, vector<16x16xf32>
    %c0_1 = arith.constant 0 : index
    %c0_2 = arith.constant 0 : index
    %1 = vector.load %arg1[%c0_1, %c0_2] : memref<16x128xf32, #tpu.memory_space<vmem>>, vector<16x128xf32>
    %c0_3 = arith.constant 0 : index
    %c0_4 = arith.constant 0 : index
    %2 = vector.load %arg2[%c0_3, %c0_4] : memref<128x8xf32, #tpu.memory_space<vmem>>, vector<128x8xf32>
    %3 = arith.truncf %0 : vector<16x16xf32> to vector<16x16xbf16>
    %4 = arith.truncf %1 : vector<16x128xf32> to vector<16x128xbf16>
    %cst = arith.constant dense<0.000000e+00> : vector<16x128xf32>
    %5 = tpu.matmul %3, %4, %cst {dimension_numbers = #tpu.dot_dimension_numbers<[1], [0], [0], [1], [0, 0, 1, 1], [], []>} : vector<16x16xbf16>, vector<16x128xbf16>, vector<16x128xf32> -> vector<16x128xf32>
    %cst_5 = arith.constant dense<0.000000e+00> : vector<16x8xf32>
    %6 = tpu.matmul %5, %2, %cst_5 {dimension_numbers = #tpu.dot_dimension_numbers<[1], [0], [0], [1], [0, 0, 1, 1], [], []>} : vector<16x128xf32>, vector<128x8xf32>, vector<16x8xf32> -> vector<16x8xf32>
    %c0_6 = arith.constant 0 : index
    %c0_7 = arith.constant 0 : index
    %7 = vector.load %arg4[%c0_6, %c0_7] : memref<16x8xf32, #tpu.memory_space<vmem>>, vector<16x8xf32>
    tpu.vector_store %arg4[%c0_6, %c0_7], %6 {strides = array<i32>} : memref<16x8xf32, #tpu.memory_space<vmem>>, vector<16x8xf32>,
    %8 = vector.extract_strided_slice %5 {offsets = [0, 0], sizes = [16, 32], strides = [1, 1]} : vector<16x128xf32> to vector<16x32xf32>
    %9 = arith.truncf %8 : vector<16x32xf32> to vector<16x32xbf16>
    %c0_8 = arith.constant 0 : index
    %c0_9 = arith.constant 0 : index
    %c0_10 = arith.constant 0 : index
    %10 = vector.load %arg3[%c0_8, %c0_9, %c0_10] : memref<4x16x32xbf16, #tpu.memory_space<vmem>>, vector<1x16x32xbf16>
    %11 = vector.shape_cast %10 : vector<1x16x32xbf16> to vector<16x32xbf16>
    %12 = vector.shape_cast %9 : vector<16x32xbf16> to vector<1x16x32xbf16>
    tpu.vector_store %arg3[%c0_8, %c0_9, %c0_10], %12 {strides = array<i32>} : memref<4x16x32xbf16, #tpu.memory_space<vmem>>, vector<1x16x32xbf16>,
    %13 = vector.extract_strided_slice %5 {offsets = [0, 32], sizes = [16, 32], strides = [1, 1]} : vector<16x128xf32> to vector<16x32xf32>
    %14 = arith.truncf %13 : vector<16x32xf32> to vector<16x32xbf16>
    %c1 = arith.constant 1 : index
    %c0_11 = arith.constant 0 : index
    %c0_12 = arith.constant 0 : index
    %15 = vector.load %arg3[%c1, %c0_11, %c0_12] : memref<4x16x32xbf16, #tpu.memory_space<vmem>>, vector<1x16x32xbf16>
    %16 = vector.shape_cast %15 : vector<1x16x32xbf16> to vector<16x32xbf16>
    %17 = vector.shape_cast %14 : vector<16x32xbf16> to vector<1x16x32xbf16>
    tpu.vector_store %arg3[%c1, %c0_11, %c0_12], %17 {strides = array<i32>} : memref<4x16x32xbf16, #tpu.memory_space<vmem>>, vector<1x16x32xbf16>,
    %18 = vector.extract_strided_slice %5 {offsets = [0, 64], sizes = [16, 32], strides = [1, 1]} : vector<16x128xf32> to vector<16x32xf32>
    %19 = arith.truncf %18 : vector<16x32xf32> to vector<16x32xbf16>
    %c2 = arith.constant 2 : index
    %c0_13 = arith.constant 0 : index
    %c0_14 = arith.constant 0 : index
    %20 = vector.load %arg3[%c2, %c0_13, %c0_14] : memref<4x16x32xbf16, #tpu.memory_space<vmem>>, vector<1x16x32xbf16>
    %21 = vector.shape_cast %20 : vector<1x16x32xbf16> to vector<16x32xbf16>
    %22 = vector.shape_cast %19 : vector<16x32xbf16> to vector<1x16x32xbf16>
    tpu.vector_store %arg3[%c2, %c0_13, %c0_14], %22 {strides = array<i32>} : memref<4x16x32xbf16, #tpu.memory_space<vmem>>, vector<1x16x32xbf16>,
    %23 = vector.extract_strided_slice %5 {offsets = [0, 96], sizes = [16, 32], strides = [1, 1]} : vector<16x128xf32> to vector<16x32xf32>
    %24 = arith.truncf %23 : vector<16x32xf32> to vector<16x32xbf16>
    %c3 = arith.constant 3 : index
    %c0_15 = arith.constant 0 : index
    %c0_16 = arith.constant 0 : index
    %25 = vector.load %arg3[%c3, %c0_15, %c0_16] : memref<4x16x32xbf16, #tpu.memory_space<vmem>>, vector<1x16x32xbf16>
    %26 = vector.shape_cast %25 : vector<1x16x32xbf16> to vector<16x32xbf16>
    %27 = vector.shape_cast %24 : vector<16x32xbf16> to vector<1x16x32xbf16>
    tpu.vector_store %arg3[%c3, %c0_15, %c0_16], %27 {strides = array<i32>} : memref<4x16x32xbf16, #tpu.memory_space<vmem>>, vector<1x16x32xbf16>,
    return
  }
}

</mosaic_0001>

<llo_original>
// kernel: tpu_custom_call.1
$region0: #{tpu_custom_call.1}
  #allocation0 [shape = 'u32[]', space=smem, size = 0x4, offset = 0x4, fixed_abs, tag = 'smem constant byte address 0x4 - core index']
  #allocation1 [shape = 'u32[144,128]{1,0:T(1,128)}', space=vmem, size = 0x12000, scoped, tag = 'internal scratch']
  %s0 = inlined_call_operand.vmem [shape: f32[16,16], index: 0, kind: input, shape index: {}]
  %s1 = inlined_call_operand.vmem [shape: f32[16,128], index: 1, kind: input, shape index: {}]
  %s2 = inlined_call_operand.vmem [shape: f32[128,8], index: 2, kind: input, shape index: {}]
  %s3 = inlined_call_operand.hbm [shape: bf16[4,16,32], index: 3, kind: output, shape index: {0}]
  %s4 = inlined_call_operand.vmem [shape: f32[16,8], index: 4, kind: output, shape index: {1}]
  %5 = xla_tuple %s3, %s4
  %s6 = sld [smem:[#allocation0]]
  $region30: #{tpu_custom_call.1} parent=0
    _
  %s8 = ssub.s32 1, %s6
  %s9 = scalar_select 0, %s8, %s6
  $region1: #{tpu_custom_call.1} parent=0
    #allocation2 [shape = 'u8[16384]{0}', space=vmem, size = 0x4000, scoped, tag = 'output window, operand 0, single buffered']
    #allocation3 [shape = 's32[1]{0}', space=sflag, size = 0x4, scoped, tag = 'scoped memory for tpu_custom_call.1']
    %10 = vsyncpa [#allocation3], 0
    // Predicated region
    $region2: #{tpu_custom_call.1} parent=1 // pred_check
      _
    $region3: #{tpu_custom_call.1} parent=1 // pred_check_branch
      %12 = sbr.rel (0) target = $region5
    $region4: #{tpu_custom_call.1} parent=1 // pred_region
      _
    $region5: #{tpu_custom_call.1} parent=1 // pred_fallthru
      _
    // Predicated region
    $region6: #{tpu_custom_call.1} parent=1 // pred_check
      _
    $region7: #{tpu_custom_call.1} parent=1 // pred_check_branch
      %14 = sbr.rel (0) target = $region9
    $region8: #{tpu_custom_call.1} parent=1 // pred_region
      _
    $region9: #{tpu_custom_call.1} parent=1 // pred_fallthru
      _
    // Predicated region
    $region10: #{tpu_custom_call.1} parent=1 // pred_check
      _
    $region11: #{tpu_custom_call.1} parent=1 // pred_check_branch
      %16 = sbr.rel (0) target = $region13
    $region12: #{tpu_custom_call.1} parent=1 // pred_region
      _
    $region13: #{tpu_custom_call.1} parent=1 // pred_fallthru
      _
    %v18 = vld [vmem:[%s0] sm:$0xff]
    %v19 = vld [vmem:[%s0 + $0x8] sm:$0xff]
    %v20 = vld [vmem:[%s1] sm:$0xff]
    %v21 = vld [vmem:[%s1 + $0x8] sm:$0xff]
    %v22 = vld [vmem:[%s2] sm:$0xff]
    %v23 = vld [vmem:[%s2 + $0x8] sm:$0xff]
    %v24 = vld [vmem:[%s2 + $0x10] sm:$0xff]
    %v25 = vld [vmem:[%s2 + $0x18] sm:$0xff]
    %v26 = vld [vmem:[%s2 + $0x20] sm:$0xff]
    %v27 = vld [vmem:[%s2 + $0x28] sm:$0xff]
    %v28 = vld [vmem:[%s2 + $0x30] sm:$0xff]
    %v29 = vld [vmem:[%s2 + $0x38] sm:$0xff]
    %v30 = vld [vmem:[%s2 + $0x40] sm:$0xff]
    %v31 = vld [vmem:[%s2 + $0x48] sm:$0xff]
    %v32 = vld [vmem:[%s2 + $0x50] sm:$0xff]
    %v33 = vld [vmem:[%s2 + $0x58] sm:$0xff]
    %v34 = vld [vmem:[%s2 + $0x60] sm:$0xff]
    %v35 = vld [vmem:[%s2 + $0x68] sm:$0xff]
    %v36 = vld [vmem:[%s2 + $0x70] sm:$0xff]
    %v37 = vld [vmem:[%s2 + $0x78] sm:$0xff]
    %v38 = vpack.c.bf16 %v19, %v18
    %v39 = vpack.c.bf16 %v21, %v20
    %vm40 = vcmask 130048
    %v42 = vsel %vm40, %v38, 0
    %44 = vmatprep.subr.bf16.mxu0 0
    %45 = vmatpush1.bf16.msra.mxu0 %v39
    %46 = vmatprep.subr.bf16.mxu0 0
    %47 = vmatpush1.bf16.msra.mxu0 0
    %48 = vmatprep.subr.bf16.mxu0 0
    %49 = vmatpush1.bf16.msra.mxu0 0
    %50 = vmatprep.subr.bf16.mxu0 0
    %51 = vmatpush1.bf16.msra.mxu0 0
    %52 = vmatprep.subr.bf16.mxu0 0
    %53 = vmatpush1.bf16.msra.mxu0 0
    %54 = vmatprep.subr.bf16.mxu0 0
    %55 = vmatpush1.bf16.msra.mxu0 0
    %56 = vmatprep.subr.bf16.mxu0 0
    %57 = vmatpush1.bf16.msra.mxu0 0
    %58 = vmatprep.subr.bf16.mxu0 0
    %59 = vmatpush1.bf16.msra.mxu0 0
    %60 = vmatprep.subr.bf16.mxu0 0
    %61 = vmatpush1.bf16.msra.mxu0 0
    %62 = vmatprep.subr.bf16.mxu0 0
    %63 = vmatpush1.bf16.msra.mxu0 0
    %64 = vmatprep.subr.bf16.mxu0 0
    %65 = vmatpush1.bf16.msra.mxu0 0
    %66 = vmatprep.subr.bf16.mxu0 0
    %67 = vmatpush1.bf16.msra.mxu0 0
    %68 = vmatprep.subr.bf16.mxu0 0
    %69 = vmatpush1.bf16.msra.mxu0 0
    %70 = vmatprep.subr.bf16.mxu0 0
    %71 = vmatpush1.bf16.msra.mxu0 0
    %72 = vmatprep.subr.bf16.mxu0 0
    %73 = vmatpush1.bf16.msra.mxu0 0
    %74 = vmatprep.subr.bf16.mxu0 0
    %75 = vmatpush1.bf16.msra.mxu0 0
    %76 = vmatprep.mubr.bf16.mxu0 0
    %77 = vmatmul.mubr.bf16.gmra.mrb[0].mxu0 %v42
    %v78 = vpop.f32.mrb[0].mxu0
    %v79 = vadd.f32 0.0, %v78
    %v80 = vpop.f32.mrb[0].mxu0
    %v81 = vpop.f32.mrb[0].mxu0
    %v82 = vadd.f32 0.0, %v81
    %v83 = vpop.f32.mrb[0].mxu0
    %84 = vdwg.mxu0
    %85 = vmatprep.subr.mxu0 0.0
    %86 = vmatpush1.msra.mxu0 %v22
    %87 = vmatprep.subr.mxu0 0.0
    %88 = vmatpush1.msra.mxu0 %v23
    %89 = vmatprep.subr.mxu0 0.0
    %90 = vmatpush1.msra.mxu0 %v24
    %91 = vmatprep.subr.mxu0 0.0
    %92 = vmatpush1.msra.mxu0 %v25
    %93 = vmatprep.subr.mxu0 0.0
    %94 = vmatpush1.msra.mxu0 %v26
    %95 = vmatprep.subr.mxu0 0.0
    %96 = vmatpush1.msra.mxu0 %v27
    %97 = vmatprep.subr.mxu0 0.0
    %98 = vmatpush1.msra.mxu0 %v28
    %99 = vmatprep.subr.mxu0 0.0
    %100 = vmatpush1.msra.mxu0 %v29
    %101 = vmatprep.subr.mxu0 0.0
    %102 = vmatpush1.msra.mxu0 %v30
    %103 = vmatprep.subr.mxu0 0.0
    %104 = vmatpush1.msra.mxu0 %v31
    %105 = vmatprep.subr.mxu0 0.0
    %106 = vmatpush1.msra.mxu0 %v32
    %107 = vmatprep.subr.mxu0 0.0
    %108 = vmatpush1.msra.mxu0 %v33
    %109 = vmatprep.subr.mxu0 0.0
    %110 = vmatpush1.msra.mxu0 %v34
    %111 = vmatprep.subr.mxu0 0.0
    %112 = vmatpush1.msra.mxu0 %v35
    %113 = vmatprep.subr.mxu0 0.0
    %114 = vmatpush1.msra.mxu0 %v36
    %115 = vmatprep.subr.mxu0 0.0
    %116 = vmatpush1.msra.mxu0 %v37
    %117 = vmatprep.subr.mxu0 0.0
    %118 = vmatpush1.msra.mxu0 0.0
    %119 = vmatprep.subr.mxu0 0.0
    %120 = vmatpush1.msra.mxu0 0.0
    %121 = vmatprep.subr.mxu0 0.0
    %122 = vmatpush1.msra.mxu0 0.0
    %123 = vmatprep.subr.mxu0 0.0
    %124 = vmatpush1.msra.mxu0 0.0
    %125 = vmatprep.subr.mxu0 0.0
    %126 = vmatpush1.msra.mxu0 0.0
    %127 = vmatprep.subr.mxu0 0.0
    %128 = vmatpush1.msra.mxu0 0.0
    %129 = vmatprep.subr.mxu0 0.0
    %130 = vmatpush1.msra.mxu0 0.0
    %131 = vmatprep.subr.mxu0 0.0
    %132 = vmatpush1.msra.mxu0 0.0
    %133 = vmatprep.subr.mxu0 0.0
    %134 = vmatpush1.msra.mxu0 0.0
    %135 = vmatprep.subr.mxu0 0.0
    %136 = vmatpush1.msra.mxu0 0.0
    %137 = vmatprep.subr.mxu0 0.0
    %138 = vmatpush1.msra.mxu0 0.0
    %139 = vmatprep.subr.mxu0 0.0
    %140 = vmatpush1.msra.mxu0 0.0
    %141 = vmatprep.subr.mxu0 0.0
    %142 = vmatpush1.msra.mxu0 0.0
    %143 = vmatprep.subr.mxu0 0.0
    %144 = vmatpush1.msra.mxu0 0.0
    %145 = vmatprep.subr.mxu0 0.0
    %146 = vmatpush1.msra.mxu0 0.0
    %147 = vmatprep.subr.mxu0 0.0
    %148 = vmatpush1.msra.mxu0 0.0
    %149 = vmatprep.mubr.f32.mxu0 0.0
    %150 = vmatmul.mubr.f32.gmra.mrb[0].mxu0 %v79
    %v151 = vpop.f32.mrb[0].mxu0
    %v152 = vadd.f32 0.0, %v151
    %v153 = vpop.f32.mrb[0].mxu0
    %154 = vmatprep.mubr.f32.mxu0 0.0
    %155 = vmatmul.mubr.f32.gmra.mrb[0].mxu0 %v82
    %v156 = vpop.f32.mrb[0].mxu0
    %v157 = vadd.f32 0.0, %v156
    %v158 = vpop.f32.mrb[0].mxu0
    %159 = vdwg.mxu0
    %vm160 = vcmask 64512
    %161 = vst.msk [vmem:[%s4] sm:$0xff] %vm160, %v152
    %162 = vst.msk [vmem:[%s4 + $0x8] sm:$0xff] %vm160, %v157
    %v163 = vpack.c.bf16 %v82, %v79
    %v165 = vunpack.c.l.b16 %v163
    %v166 = vunpack.c.h.b16 %v163
    %v167 = vpack.c.b16 %v165, %v165
    %v168 = vpack.c.b16 %v166, %v166
    %vm171 = vcmask 257024
    %172 = vst.msk [vmem:[#allocation2] sm:$0xf] %vm171, %v167
    %173 = vst.msk [vmem:[#allocation2 + $0x4] sm:$0xf] %vm171, %v168
    %174 = vrot.lane.b32.xlu0 %v167, 96
    %v175 = vpop.permute.xlu0 %174
    %176 = vrot.lane.b32.xlu0 %v168, 96
    %v177 = vpop.permute.xlu0 %176
    %s180 = scalar_lea.vmem [#allocation2], 8
    %181 = vst.msk [vmem:[%s180] sm:$0xf] %vm171, %v175
    %182 = vst.msk [vmem:[%s180 + $0x4] sm:$0xf] %vm171, %v177
    %183 = vrot.lane.b32.xlu0 %v167, 64
    %v184 = vpop.permute.xlu0 %183
    %185 = vrot.lane.b32.xlu0 %v168, 64
    %v186 = vpop.permute.xlu0 %185
    %s189 = scalar_lea.vmem [#allocation2], 16
    %190 = vst.msk [vmem:[%s189] sm:$0xf] %vm171, %v184
    %191 = vst.msk [vmem:[%s189 + $0x4] sm:$0xf] %vm171, %v186
    %192 = vrot.lane.b32.xlu0 %v167, 32
    %v193 = vpop.permute.xlu0 %192
    %194 = vrot.lane.b32.xlu0 %v168, 32
    %v195 = vpop.permute.xlu0 %194
    %s198 = scalar_lea.vmem [#allocation2], 24
    %199 = vst.msk [vmem:[%s198] sm:$0xf] %vm171, %v193
    %200 = vst.msk [vmem:[%s198 + $0x4] sm:$0xf] %vm171, %v195
    // Predicated region
    $region14: #{tpu_custom_call.1} parent=1 // pred_check
      _
    $region15: #{tpu_custom_call.1} parent=1 // pred_check_branch
      %202 = sbr.rel (0) target = $region17
    $region16: #{tpu_custom_call.1} parent=1 // pred_region
      %s204 = ssub.s32 512, 512
      %205 = vsyncadd [#allocation3], %s204
      %s206 = sshll.u32 [#allocation2], 4
      %s207 = int_to_ptr.vmem [resolvable:$true] %s206
      %212 = dma.vmem_to_hbm [thread:$0]  %s207, 512, %s3, [#allocation3], 64, 64, 4
    $region17: #{tpu_custom_call.1} parent=1 // pred_fallthru
      _
    // Predicated region
    $region18: #{tpu_custom_call.1} parent=1 // pred_check
      _
    $region19: #{tpu_custom_call.1} parent=1 // pred_check_branch
      %214 = sbr.rel (0) target = $region21
    $region20: #{tpu_custom_call.1} parent=1 // pred_region
      _
    $region21: #{tpu_custom_call.1} parent=1 // pred_fallthru
      _
    // Predicated region
    $region22: #{tpu_custom_call.1} parent=1 // pred_check
      _
    $region23: #{tpu_custom_call.1} parent=1 // pred_check_branch
      %216 = sbr.rel (0) target = $region25
    $region24: #{tpu_custom_call.1} parent=1 // pred_region
      %217 = dma.done [#allocation3], 512
    $region25: #{tpu_custom_call.1} parent=1 // pred_fallthru
      _
    // Predicated region
    $region26: #{tpu_custom_call.1} parent=1 // pred_check
      _
    $region27: #{tpu_custom_call.1} parent=1 // pred_check_branch
      %219 = sbr.rel (0) target = $region29
    $region28: #{tpu_custom_call.1} parent=1 // pred_region
      _
    $region29: #{tpu_custom_call.1} parent=1 // pred_fallthru
      _
    %220 = vsyncpa [#allocation3], 1

</llo_original>
